<compile_context>
chip_gen: v6e
topology: v6e:2x2x1
jax: 0.10.0
libtpu: 0.0.40
codegen_flags: <defaults>
</compile_context>

<pallas_src>
import math

import jax
import jax.numpy as jnp
from jax import lax
from jax.experimental import pallas as pl
from jax.experimental.pallas import tpu as pltpu


def _round_up(x, m):
    return ((x + m - 1) // m) * m


def _cdiv(a, b):
    return (a + b - 1) // b


# ---------------------------------------------------------------------------
# Device query (defensive: falls back to the most conservative generation).
# ---------------------------------------------------------------------------
def _device_info():
    vmem_cap = 64 << 20                      # v7x per-TC VMEM (smallest of all gens)
    try:
        vmem_cap = int(pltpu.get_tpu_info().vmem_capacity_bytes)
    except Exception:
        pass
    num_tc = 1
    try:
        kind = jax.devices()[0].device_kind.lower()
        if "v7" in kind or "7x" in kind:
            num_tc = 2                       # v7x: 2 TensorCores share "parallel" axes
    except Exception:
        pass
    return vmem_cap, num_tc


# ---------------------------------------------------------------------------
# Kernels
# ---------------------------------------------------------------------------
def _make_kernel(use_scratch, approximate_gelu):
    inv_sqrt2 = 1.0 / math.sqrt(2.0)
    c_tanh = math.sqrt(2.0 / math.pi)

    def _gelu(h):
        if approximate_gelu:
            # tanh approximation -> EUP slot (cheaper than the erf polynomial on VPU)
            return 0.5 * h * (1.0 + jnp.tanh(c_tanh * (h + 0.044715 * h * h * h)))
        # exact erf form (matches nn.GELU() default)
        return 0.5 * h * (1.0 + lax.erf(h * inv_sqrt2))

    if use_scratch:
        # non-f32 output: accumulate in a f32 VMEM scratch, cast once at the end.
        def kernel(x_ref, w1_ref, b1_ref, w2_ref, b2_ref, o_ref, acc_ref):
            f = pl.program_id(1)

            @pl.when(f == 0)
            def _():
                acc_ref[...] = jnp.broadcast_to(b2_ref[...], acc_ref.shape)

            h = jnp.dot(x_ref[...], w1_ref[...],
                        preferred_element_type=jnp.float32)
            g = _gelu(h + b1_ref[...])
            acc_ref[...] += jnp.dot(g.astype(w2_ref.dtype), w2_ref[...],
                                    preferred_element_type=jnp.float32)

            @pl.when(f == pl.num_programs(1) - 1)
            def _():
                o_ref[...] = acc_ref[...].astype(o_ref.dtype)
    else:
        # f32 output: the output tile is itself the accumulator (it is resident
        # across the f axis); b2 is folded into the f==0 init.
        def kernel(x_ref, w1_ref, b1_ref, w2_ref, b2_ref, o_ref):
            f = pl.program_id(1)

            @pl.when(f == 0)
            def _():
                o_ref[...] = jnp.broadcast_to(b2_ref[...], o_ref.shape)

            h = jnp.dot(x_ref[...], w1_ref[...],
                        preferred_element_type=jnp.float32)
            g = _gelu(h + b1_ref[...])
            o_ref[...] += jnp.dot(g.astype(w2_ref.dtype), w2_ref[...],
                                  preferred_element_type=jnp.float32)

    return kernel


# ---------------------------------------------------------------------------
# Tile selection from the per-core VMEM budget
# ---------------------------------------------------------------------------
def _pick_tiles(m_rows, Hp, Fp, isz, osz, use_scratch, row_align, budget, num_tc):
    # Larger FFN slices for decode-sized row tiles: fewer grid steps, bigger DMAs.
    if m_rows <= 64:
        tf = 2048
    elif m_rows <= 256:
        tf = 1024
    else:
        tf = 512
    tf = min(tf, Fp)

    def working(tm, tf):
        return (2 * tm * Hp * isz                # x tiles (double-buffered)
                + 2 * tm * Hp * osz              # out tiles (double-buffered)
                + 2 * Hp * tf * isz              # W1 slices
                + 2 * tf * Hp * isz              # W2 slices
                + 4 * (tf + Hp) * 4              # bias slices (f32)
                + 2 * tm * tf * 4                # h / g f32 intermediates
                + (tm * Hp * 4 if use_scratch else 0))

    tm = None
    for cand in (1024, 768, 512, 384, 256, 192, 128, 96, 64, 32, 16, 8):
        c = min(cand, m_rows)
        c = _round_up(c, row_align)
        if working(c, tf) <= budget:
            tm = c
            break
    if tm is None:
        tm = row_align
        while tf > 128 and working(tm, tf) > budget:
            tf = max(128, tf // 2)

    # v7x megacore: guarantee >= 2 row tiles along the "parallel" M axis when
    # there are enough rows, so the second TensorCore is not idle.
    if num_tc > 1 and m_rows > row_align:
        tm = min(tm, _round_up(_cdiv(m_rows, num_tc), row_align))

    return tm, tf, working(tm, tf)


# ---------------------------------------------------------------------------
# Wrapper
# ---------------------------------------------------------------------------
def ffn_pallas(x, w1, b1, w2, b2, *, compute_dtype=jnp.bfloat16,
               approximate_gelu=False, tm=None, tf=None):
    """x: [..., H]; w1: [H, F]; b1: [F]; w2: [F, H]; b2: [H] -> [..., H].

    compute_dtype: dtype of the MXU operands (x, W1, g, W2).  Accumulation,
    GELU and biases always stay in float32.
    """
    out_dtype = jnp.dtype(x.dtype)
    H = x.shape[-1]
    F = w1.shape[1]
    M = 1
    for d in x.shape[:-1]:
        M *= int(d)

    cdt = jnp.dtype(compute_dtype) if compute_dtype is not None else out_dtype
    isz = cdt.itemsize
    osz = out_dtype.itemsize
    use_scratch = out_dtype != jnp.dtype(jnp.float32)
    row_align = 16 if isz < 4 else 8          # full bf16 sublane packing

    Hp = _round_up(H, 128)
    Fp0 = _round_up(F, 128)
    m_rows = _round_up(max(M, 1), row_align)

    vmem_cap, num_tc = _device_info()
    budget = int(vmem_cap * 0.85)

    a_tm, a_tf, work = _pick_tiles(m_rows, Hp, Fp0, isz, osz, use_scratch,
                                   row_align, budget, num_tc)
    if tm is not None:
        a_tm = _round_up(min(tm, m_rows), row_align)
    if tf is not None:
        a_tf = min(_round_up(tf, 128), Fp0)
    if tm is not None or tf is not None:
        work = (2 * a_tm * Hp * isz + 2 * a_tm * Hp * osz
                + 2 * Hp * a_tf * isz + 2 * a_tf * Hp * isz
                + 4 * (a_tf + Hp) * 4 + 2 * a_tm * a_tf * 4
                + (a_tm * Hp * 4 if use_scratch else 0))

    Mp = _round_up(m_rows, a_tm)
    Fp = _round_up(Fp0, a_tf)

    # ---- cast MXU operands / pad only when actually needed (no-op for the
    # typical already-aligned, already-bf16 weights) ----
    x2d = x.reshape(M, H)
    if x2d.dtype != cdt:
        x2d = x2d.astype(cdt)
    w1c = w1 if w1.dtype == cdt else w1.astype(cdt)
    w2c = w2 if w2.dtype == cdt else w2.astype(cdt)
    if (Mp, Hp) != (M, H):
        x2d = jnp.pad(x2d, ((0, Mp - M), (0, Hp - H)))
    if w1c.shape != (Hp, Fp):
        w1c = jnp.pad(w1c, ((0, Hp - H), (0, Fp - F)))
    if w2c.shape != (Fp, Hp):
        w2c = jnp.pad(w2c, ((0, Fp - F), (0, Hp - H)))
    b1p = b1.astype(jnp.float32)
    if Fp != F:
        b1p = jnp.pad(b1p, (0, Fp - F))
    b1p = b1p.reshape(1, Fp)
    b2p = b2.astype(jnp.float32)
    if Hp != H:
        b2p = jnp.pad(b2p, (0, Hp - H))
    b2p = b2p.reshape(1, Hp)

    # ---- VMEM limit: derived from the working set, clamped to the device ----
    vmem_limit = int(min(max(int(work * 1.25), 32 << 20), int(vmem_cap * 0.9)))

    # ---- cost model (weights are re-streamed once per row tile) ----
    n_row_tiles = Mp // a_tm
    cost = pl.CostEstimate(
        flops=4 * M * H * F,                  # two matmuls, 2*M*H*F each
        transcendentals=M * F,                # erf/tanh per hidden activation
        bytes_accessed=(M * H * isz + M * H * osz
                        + (H * F + F * H) * isz * n_row_tiles
                        + (F + H) * 4 * n_row_tiles),
    )

    kernel = _make_kernel(use_scratch, approximate_gelu)
    scratch = [pltpu.VMEM((a_tm, Hp), jnp.float32)] if use_scratch else []

    out = pl.pallas_call(
        kernel,
        out_shape=jax.ShapeDtypeStruct((Mp, Hp), out_dtype),
        grid_spec=pltpu.PrefetchScalarGridSpec(
            num_scalar_prefetch=0,
            grid=(Mp // a_tm, Fp // a_tf),
            in_specs=[
                pl.BlockSpec((a_tm, Hp), lambda i, f: (i, 0)),   # x rows
                pl.BlockSpec((Hp, a_tf), lambda i, f: (0, f)),   # W1 slice
                pl.BlockSpec((1, a_tf), lambda i, f: (0, f)),    # b1 slice
                pl.BlockSpec((a_tf, Hp), lambda i, f: (f, 0)),   # W2 slice
                pl.BlockSpec((1, Hp), lambda i, f: (0, 0)),      # b2
            ],
            out_specs=pl.BlockSpec((a_tm, Hp), lambda i, f: (i, 0)),
            scratch_shapes=scratch,
        ),
        compiler_params=pltpu.CompilerParams(
            dimension_semantics=("parallel", "arbitrary"),
            vmem_limit_bytes=vmem_limit,
        ),
        cost_estimate=cost,
    )(x2d, w1c, b1p, w2c, b2p)

    return out[:M, :H].reshape(x.shape)


# ---------------------------------------------------------------------------
# Reference + init (mirrors nn.Linear / nn.GELU defaults)
# ---------------------------------------------------------------------------
def init_params(key, hidden_size, ffn_size, dtype=jnp.float32):
    k1, k2, k3, k4 = jax.random.split(key, 4)
    lim1 = 1.0 / math.sqrt(hidden_size)
    lim2 = 1.0 / math.sqrt(ffn_size)
    # stored as [in, out] (transposed vs PyTorch's [out, in])
    w1 = jax.random.uniform(k1, (hidden_size, ffn_size), dtype, -lim1, lim1)
    b1 = jax.random.uniform(k2, (ffn_size,), dtype, -lim1, lim1)
    w2 = jax.random.uniform(k3, (ffn_size, hidden_size), dtype, -lim2, lim2)
    b2 = jax.random.uniform(k4, (hidden_size,), dtype, -lim2, lim2)
    return w1, b1, w2, b2


def ffn_reference(x, w1, b1, w2, b2):
    h = x @ w1 + b1
    g = 0.5 * h * (1.0 + lax.erf(h / jnp.sqrt(2.0).astype(h.dtype)))
    return g @ w2 + b2


if __name__ == "__main__":
    B, S, H, FFN = 2, 8, 32, 64    # batch=2, seq=8, hidden=32, ffn=64
    key = jax.random.PRNGKey(0)
    kx, kp = jax.random.split(key)

    x = jax.random.normal(kx, (B, S, H), jnp.float32)
    w1, b1, w2, b2 = init_params(kp, H, FFN)

    ref = ffn_reference(x, w1, b1, w2, b2)

    # Exact f32-operand path: must match the reference tightly.
    out_f32 = jax.block_until_ready(
        ffn_pallas(x, w1, b1, w2, b2, compute_dtype=jnp.float32))
    assert out_f32.shape == (B, S, H)
    assert jnp.allclose(out_f32, ref, atol=1e-5, rtol=1e-5)

    # Default path: bf16 MXU operands, f32 accumulate / GELU / biases.
    out_def = jax.block_until_ready(ffn_pallas(x, w1, b1, w2, b2))
    assert out_def.shape == (B, S, H)
    assert jnp.allclose(out_def, ref, atol=5e-2, rtol=5e-2)

    print("KERNEL_OK")
</pallas_src>

<mosaic_0001>
module attributes {stable_mosaic.version = 11 : i64} {
  func.func @kernel(%arg0: i32, %arg1: i32, %arg2: memref<16x128xf32, #tpu.memory_space<vmem>>, %arg3: memref<128x128xf32, #tpu.memory_space<vmem>>, %arg4: memref<1x128xf32, #tpu.memory_space<vmem>>, %arg5: memref<128x128xf32, #tpu.memory_space<vmem>>, %arg6: memref<1x128xf32, #tpu.memory_space<vmem>>, %arg7: memref<16x128xf32, #tpu.memory_space<vmem>>) attributes {dimension_semantics = [#tpu.dimension_semantics<parallel>, #tpu.dimension_semantics<arbitrary>], iteration_bounds = array<i64: 1, 1>, scalar_prefetch = 0 : i64, scratch_operands = 0 : i64, tpu.core_type = #tpu.core_type<tc>, window_params = [{transform_indices = @transform_0, window_bounds = array<i64: 16, 128>}, {transform_indices = @transform_1, window_bounds = array<i64: 128, 128>}, {transform_indices = @transform_2, window_bounds = array<i64: 1, 128>}, {transform_indices = @transform_3, window_bounds = array<i64: 128, 128>}, {pipeline_mode = #tpu.pipeline_mode<synchronous>, transform_indices = @transform_4, window_bounds = array<i64: 1, 128>}, {transform_indices = @transform_5, window_bounds = array<i64: 16, 128>}]} {
    %c0_i32 = arith.constant 0 : i32
    %0 = arith.cmpi eq, %arg1, %c0_i32 : i32
    %1 = arith.extui %0 : i1 to i32
    %c0_i32_0 = arith.constant 0 : i32
    %2 = arith.cmpi ne, %1, %c0_i32_0 : i32
    scf.if %2 {
      %c0_16 = arith.constant 0 : index
      %c0_17 = arith.constant 0 : index
      %22 = vector.load %arg6[%c0_16, %c0_17] : memref<1x128xf32, #tpu.memory_space<vmem>>, vector<1x128xf32>
      %23 = vector.shape_cast %22 : vector<1x128xf32> to vector<1x128xf32>
      %24 = vector.broadcast %23 : vector<1x128xf32> to vector<16x128xf32>
      %c0_18 = arith.constant 0 : index
      %c0_19 = arith.constant 0 : index
      %25 = vector.load %arg7[%c0_18, %c0_19] : memref<16x128xf32, #tpu.memory_space<vmem>>, vector<16x128xf32>
      tpu.vector_store %arg7[%c0_18, %c0_19], %24 {strides = array<i32>} : memref<16x128xf32, #tpu.memory_space<vmem>>, vector<16x128xf32>,
    } else {
    }
    %c0 = arith.constant 0 : index
    %c0_1 = arith.constant 0 : index
    %3 = vector.load %arg2[%c0, %c0_1] : memref<16x128xf32, #tpu.memory_space<vmem>>, vector<16x128xf32>
    %c0_2 = arith.constant 0 : index
    %c0_3 = arith.constant 0 : index
    %4 = vector.load %arg3[%c0_2, %c0_3] : memref<128x128xf32, #tpu.memory_space<vmem>>, vector<128x128xf32>
    %cst = arith.constant dense<0.000000e+00> : vector<16x128xf32>
    %5 = tpu.matmul %3, %4, %cst {dimension_numbers = #tpu.dot_dimension_numbers<[1], [0], [0], [1], [0, 0, 1, 1], [], []>} : vector<16x128xf32>, vector<128x128xf32>, vector<16x128xf32> -> vector<16x128xf32>
    %c0_4 = arith.constant 0 : index
    %c0_5 = arith.constant 0 : index
    %6 = vector.load %arg4[%c0_4, %c0_5] : memref<1x128xf32, #tpu.memory_space<vmem>>, vector<1x128xf32>
    %7 = vector.broadcast %6 : vector<1x128xf32> to vector<16x128xf32>
    %8 = arith.addf %5, %7 : vector<16x128xf32>
    %cst_6 = arith.constant 5.000000e-01 : f32
    %9 = vector.broadcast %cst_6 : f32 to vector<16x128xf32>
    %10 = arith.mulf %9, %8 : vector<16x128xf32>
    %cst_7 = arith.constant 0.707106769 : f32
    %11 = vector.broadcast %cst_7 : f32 to vector<16x128xf32>
    %12 = arith.mulf %8, %11 : vector<16x128xf32>
    %13 = math.erf %12 : vector<16x128xf32>
    %cst_8 = arith.constant 1.000000e+00 : f32
    %14 = vector.broadcast %cst_8 : f32 to vector<16x128xf32>
    %15 = arith.addf %14, %13 : vector<16x128xf32>
    %16 = arith.mulf %10, %15 : vector<16x128xf32>
    %c0_9 = arith.constant 0 : index
    %c0_10 = arith.constant 0 : index
    %17 = vector.load %arg7[%c0_9, %c0_10] : memref<16x128xf32, #tpu.memory_space<vmem>>, vector<16x128xf32>
    %c0_11 = arith.constant 0 : index
    %c0_12 = arith.constant 0 : index
    %18 = vector.load %arg5[%c0_11, %c0_12] : memref<128x128xf32, #tpu.memory_space<vmem>>, vector<128x128xf32>
    %cst_13 = arith.constant dense<0.000000e+00> : vector<16x128xf32>
    %19 = tpu.matmul %16, %18, %cst_13 {dimension_numbers = #tpu.dot_dimension_numbers<[1], [0], [0], [1], [0, 0, 1, 1], [], []>} : vector<16x128xf32>, vector<128x128xf32>, vector<16x128xf32> -> vector<16x128xf32>
    %20 = arith.addf %17, %19 : vector<16x128xf32>
    %c0_14 = arith.constant 0 : index
    %c0_15 = arith.constant 0 : index
    %21 = vector.load %arg7[%c0_14, %c0_15] : memref<16x128xf32, #tpu.memory_space<vmem>>, vector<16x128xf32>
    tpu.vector_store %arg7[%c0_14, %c0_15], %20 {strides = array<i32>} : memref<16x128xf32, #tpu.memory_space<vmem>>, vector<16x128xf32>,
    return
  }
  func.func @transform_0(%arg0: i32, %arg1: i32) -> (i32, i32) {
    %c0_i32 = arith.constant 0 : i32
    %c0_i32_0 = arith.constant 0 : i32
    return %arg0, %c0_i32 : i32, i32
  }
  func.func @transform_1(%arg0: i32, %arg1: i32) -> (i32, i32) {
    %c0_i32 = arith.constant 0 : i32
    %c0_i32_0 = arith.constant 0 : i32
    return %c0_i32, %arg1 : i32, i32
  }
  func.func @transform_2(%arg0: i32, %arg1: i32) -> (i32, i32) {
    %c0_i32 = arith.constant 0 : i32
    %c0_i32_0 = arith.constant 0 : i32
    return %c0_i32, %arg1 : i32, i32
  }
  func.func @transform_3(%arg0: i32, %arg1: i32) -> (i32, i32) {
    %c0_i32 = arith.constant 0 : i32
    %c0_i32_0 = arith.constant 0 : i32
    return %arg1, %c0_i32 : i32, i32
  }
  func.func @transform_4(%arg0: i32, %arg1: i32) -> (i32, i32) {
    %c0_i32 = arith.constant 0 : i32
    %c0_i32_0 = arith.constant 0 : i32
    %c0_i32_1 = arith.constant 0 : i32
    return %c0_i32, %c0_i32_0 : i32, i32
  }
  func.func @transform_5(%arg0: i32, %arg1: i32) -> (i32, i32) {
    %c0_i32 = arith.constant 0 : i32
    %c0_i32_0 = arith.constant 0 : i32
    return %arg0, %c0_i32 : i32, i32
  }
}

</mosaic_0001>

<llo_original>
// kernel: tpu_custom_call.1
$region0: #{tpu_custom_call.1}
  #allocation0 [shape = 'u32[]', space=smem, size = 0x4, offset = 0x4, fixed_abs, tag = 'smem constant byte address 0x4 - core index']
  #allocation1 [shape = 'u32[144,128]{1,0:T(1,128)}', space=vmem, size = 0x12000, scoped, tag = 'internal scratch']
  %s0 = inlined_call_operand.hbm [shape: f32[16,128], index: 0, kind: input, shape index: {}]
  %s1 = inlined_call_operand.hbm [shape: f32[128,128], index: 1, kind: input, shape index: {}]
  %s2 = inlined_call_operand.vmem [shape: f32[1,128], index: 2, kind: input, shape index: {}]
  %s3 = inlined_call_operand.hbm [shape: f32[128,128], index: 3, kind: input, shape index: {}]
  %s4 = inlined_call_operand.vmem [shape: f32[1,128], index: 4, kind: input, shape index: {}]
  %s5 = inlined_call_operand.hbm [shape: f32[16,128], index: 5, kind: output, shape index: {}]
  %s6 = sld [smem:[#allocation0]]
  $region46: #{tpu_custom_call.1} parent=0
    _
  %s8 = ssub.s32 1, %s6
  %s9 = scalar_select 0, %s8, %s6
  $region1: #{tpu_custom_call.1} parent=0
    #allocation2 [shape = 'u8[8192]{0}', space=vmem, size = 0x2000, scoped, tag = 'input window, operand 0, single buffered']
    #allocation3 [shape = 's32[1]{0}', space=sflag, size = 0x4, scoped, tag = 'scoped memory for tpu_custom_call.1']
    #allocation4 [shape = 's32[1]{0}', space=sflag, size = 0x4, scoped, tag = 'scoped memory for tpu_custom_call.1']
    #allocation5 [shape = 'u8[65536]{0}', space=vmem, size = 0x10000, scoped, tag = 'input window, operand 1, single buffered']
    #allocation6 [shape = 's32[1]{0}', space=sflag, size = 0x4, scoped, tag = 'scoped memory for tpu_custom_call.1']
    #allocation7 [shape = 'u8[65536]{0}', space=vmem, size = 0x10000, scoped, tag = 'input window, operand 3, single buffered']
    #allocation8 [shape = 'u8[8192]{0}', space=vmem, size = 0x2000, scoped, tag = 'output window, operand 0, single buffered']
    %10 = vsyncpa [#allocation3], 0
    %11 = vsyncpa [#allocation6], 0
    %12 = vsyncpa [#allocation4], 0
    // Predicated region
    $region2: #{tpu_custom_call.1} parent=1 // pred_check
      _
    $region3: #{tpu_custom_call.1} parent=1 // pred_check_branch
      %14 = sbr.rel (0) target = $region5
    $region4: #{tpu_custom_call.1} parent=1 // pred_region
      %s16 = ssub.s32 256, 256
      %17 = vsyncadd [#allocation3], %s16
      %s18 = sshll.u32 [#allocation2], 4
      %s19 = int_to_ptr.vmem [resolvable:$true] %s18
      %24 = dma.hbm_to_vmem [thread:$0]  %s0, 256, %s19, [#allocation3], 128, 128, 8
    $region5: #{tpu_custom_call.1} parent=1 // pred_fallthru
      _
    // Predicated region
    $region6: #{tpu_custom_call.1} parent=1 // pred_check
      _
    $region7: #{tpu_custom_call.1} parent=1 // pred_check_branch
      %26 = sbr.rel (0) target = $region9
    $region8: #{tpu_custom_call.1} parent=1 // pred_region
      %s28 = ssub.s32 2048, 2048
      %29 = vsyncadd [#allocation6], %s28
      %s30 = sshll.u32 [#allocation5], 4
      %s31 = int_to_ptr.vmem [resolvable:$true] %s30
      %36 = dma.hbm_to_vmem [thread:$0]  %s1, 2048, %s31, [#allocation6], 128, 128, 8
    $region9: #{tpu_custom_call.1} parent=1 // pred_fallthru
      _
    // Predicated region
    $region10: #{tpu_custom_call.1} parent=1 // pred_check
      _
    $region11: #{tpu_custom_call.1} parent=1 // pred_check_branch
      %38 = sbr.rel (0) target = $region13
    $region12: #{tpu_custom_call.1} parent=1 // pred_region
      _
    $region13: #{tpu_custom_call.1} parent=1 // pred_fallthru
      _
    // Predicated region
    $region14: #{tpu_custom_call.1} parent=1 // pred_check
      _
    $region15: #{tpu_custom_call.1} parent=1 // pred_check_branch
      %40 = sbr.rel (0) target = $region17
    $region16: #{tpu_custom_call.1} parent=1 // pred_region
      %s42 = ssub.s32 2048, 2048
      %43 = vsyncadd [#allocation6], %s42
      %s44 = sshll.u32 [#allocation7], 4
      %s45 = int_to_ptr.vmem [resolvable:$true] %s44
      %50 = dma.hbm_to_vmem [thread:$0]  %s3, 2048, %s45, [#allocation6], 128, 128, 8
    $region17: #{tpu_custom_call.1} parent=1 // pred_fallthru
      _
    // Predicated region
    $region18: #{tpu_custom_call.1} parent=1 // pred_check
      _
    $region19: #{tpu_custom_call.1} parent=1 // pred_check_branch
      %52 = sbr.rel (0) target = $region21
    $region20: #{tpu_custom_call.1} parent=1 // pred_region
      _
    $region21: #{tpu_custom_call.1} parent=1 // pred_fallthru
      _
    // Predicated region
    $region22: #{tpu_custom_call.1} parent=1 // pred_check
      _
    $region23: #{tpu_custom_call.1} parent=1 // pred_check_branch
      %54 = sbr.rel (0) target = $region25
    $region24: #{tpu_custom_call.1} parent=1 // pred_region
      %55 = dma.done [#allocation3], 256
    $region25: #{tpu_custom_call.1} parent=1 // pred_fallthru
      _
    // Predicated region
    $region26: #{tpu_custom_call.1} parent=1 // pred_check
      _
    $region27: #{tpu_custom_call.1} parent=1 // pred_check_branch
      %57 = sbr.rel (0) target = $region29
    $region28: #{tpu_custom_call.1} parent=1 // pred_region
      %58 = dma.done [#allocation6], 2048
    $region29: #{tpu_custom_call.1} parent=1 // pred_fallthru
      _
    // Predicated region
    $region30: #{tpu_custom_call.1} parent=1 // pred_check
      _
    $region31: #{tpu_custom_call.1} parent=1 // pred_check_branch
      %60 = sbr.rel (0) target = $region33
    $region32: #{tpu_custom_call.1} parent=1 // pred_region
      %61 = dma.done [#allocation6], 2048
    $region33: #{tpu_custom_call.1} parent=1 // pred_fallthru
      _
    %p62 = scmp.eq.s32.totalorder 0, 0
    // Predicated region
    $region34: #{tpu_custom_call.1} parent=1 // pred_check
      %p63 = pneg %p62
    $region35: #{tpu_custom_call.1} parent=1 // pred_check_branch
      %65 = sbr.rel (%p63) target = $region37
    $region36: #{tpu_custom_call.1} parent=1 // pred_region
      %v66 = vld [vmem:[%s4] sm:$0x1]
      %v68 = vlaneseq
      %v69 = vshrl.u32 %v68, 7
      %v70 = vsub.s32 0, %v69
      %v71 = vrot.slane %v66, %v70
      %73 = vst [vmem:[#allocation8] sm:$0xff] %v71
      %74 = vst [vmem:[#allocation8 + $0x8] sm:$0xff] %v71
    $region37: #{tpu_custom_call.1} parent=1 // pred_fallthru
      _
    %v75 = vld [vmem:[#allocation2] sm:$0xff]
    %v76 = vld [vmem:[#allocation2 + $0x8] sm:$0xff]
    %v77 = vld [vmem:[#allocation5] sm:$0xff]
    %v78 = vld [vmem:[#allocation5 + $0x8] sm:$0xff]
    %v79 = vld [vmem:[#allocation5 + $0x10] sm:$0xff]
    %v80 = vld [vmem:[#allocation5 + $0x18] sm:$0xff]
    %v81 = vld [vmem:[#allocation5 + $0x20] sm:$0xff]
    %v82 = vld [vmem:[#allocation5 + $0x28] sm:$0xff]
    %v83 = vld [vmem:[#allocation5 + $0x30] sm:$0xff]
    %v84 = vld [vmem:[#allocation5 + $0x38] sm:$0xff]
    %v85 = vld [vmem:[#allocation5 + $0x40] sm:$0xff]
    %v86 = vld [vmem:[#allocation5 + $0x48] sm:$0xff]
    %v87 = vld [vmem:[#allocation5 + $0x50] sm:$0xff]
    %v88 = vld [vmem:[#allocation5 + $0x58] sm:$0xff]
    %v89 = vld [vmem:[#allocation5 + $0x60] sm:$0xff]
    %v90 = vld [vmem:[#allocation5 + $0x68] sm:$0xff]
    %v91 = vld [vmem:[#allocation5 + $0x70] sm:$0xff]
    %v92 = vld [vmem:[#allocation5 + $0x78] sm:$0xff]
    %v93 = vld [vmem:[%s2] sm:$0x1]
    %v95 = vlaneseq
    %v96 = vshrl.u32 %v95, 7
    %v97 = vsub.s32 0, %v96
    %v98 = vrot.slane %v93, %v97
    %100 = vmatprep.subr.mxu0 0.0
    %101 = vmatpush1.msra.mxu0 %v92
    %102 = vmatprep.subr.mxu0 0.0
    %103 = vmatpush1.msra.mxu0 %v91
    %104 = vmatprep.subr.mxu0 0.0
    %105 = vmatpush1.msra.mxu0 %v90
    %106 = vmatprep.subr.mxu0 0.0
    %107 = vmatpush1.msra.mxu0 %v89
    %108 = vmatprep.subr.mxu0 0.0
    %109 = vmatpush1.msra.mxu0 %v88
    %110 = vmatprep.subr.mxu0 0.0
    %111 = vmatpush1.msra.mxu0 %v87
    %112 = vmatprep.subr.mxu0 0.0
    %113 = vmatpush1.msra.mxu0 %v86
    %114 = vmatprep.subr.mxu0 0.0
    %115 = vmatpush1.msra.mxu0 %v85
    %116 = vmatprep.subr.mxu0 0.0
    %117 = vmatpush1.msra.mxu0 %v84
    %118 = vmatprep.subr.mxu0 0.0
    %119 = vmatpush1.msra.mxu0 %v83
    %120 = vmatprep.subr.mxu0 0.0
    %121 = vmatpush1.msra.mxu0 %v82
    %122 = vmatprep.subr.mxu0 0.0
    %123 = vmatpush1.msra.mxu0 %v81
    %124 = vmatprep.subr.mxu0 0.0
    %125 = vmatpush1.msra.mxu0 %v80
    %126 = vmatprep.subr.mxu0 0.0
    %127 = vmatpush1.msra.mxu0 %v79
    %128 = vmatprep.subr.mxu0 0.0
    %129 = vmatpush1.msra.mxu0 %v78
    %130 = vmatprep.subr.mxu0 0.0
    %131 = vmatpush1.msra.mxu0 %v77
    %132 = vmatprep.subr.mxu0 0.0
    %133 = vmatpush2.msra.mxu0 0.0
    %134 = vmatprep.subr.mxu0 0.0
    %135 = vmatpush2.msra.mxu0 0.0
    %136 = vmatprep.subr.mxu0 0.0
    %137 = vmatpush2.msra.mxu0 0.0
    %138 = vmatprep.subr.mxu0 0.0
    %139 = vmatpush2.msra.mxu0 0.0
    %140 = vmatprep.subr.mxu0 0.0
    %141 = vmatpush2.msra.mxu0 0.0
    %142 = vmatprep.subr.mxu0 0.0
    %143 = vmatpush2.msra.mxu0 0.0
    %144 = vmatprep.subr.mxu0 0.0
    %145 = vmatpush2.msra.mxu0 0.0
    %146 = vmatprep.subr.mxu0 0.0
    %147 = vmatpush2.msra.mxu0 0.0
    %148 = vmatprep.subr.mxu0 0.0
    %149 = vmatpush2.msra.mxu0 0.0
    %150 = vmatprep.subr.mxu0 0.0
    %151 = vmatpush2.msra.mxu0 0.0
    %152 = vmatprep.subr.mxu0 0.0
    %153 = vmatpush2.msra.mxu0 0.0
    %154 = vmatprep.subr.mxu0 0.0
    %155 = vmatpush2.msra.mxu0 0.0
    %156 = vmatprep.subr.mxu0 0.0
    %157 = vmatpush2.msra.mxu0 0.0
    %158 = vmatprep.subr.mxu0 0.0
    %159 = vmatpush2.msra.mxu0 0.0
    %160 = vmatprep.subr.mxu0 0.0
    %161 = vmatpush2.msra.mxu0 0.0
    %162 = vmatprep.subr.mxu0 0.0
    %163 = vmatpush2.msra.mxu0 0.0
    %164 = vmatprep.mubr.f32.mxu0 0.0
    %165 = vmatmul.mubr.f32.gmra.mxu0 %v75
    %v166 = vpop.f32.mrf.mxu0
    %v167 = vadd.f32 %v98, %v166
    %v168 = vpop.f32.mrf.mxu0
    %169 = vmatprep.mubr.f32.mxu0 0.0
    %170 = vmatmul.mubr.f32.gmra.mxu0 %v76
    %v171 = vpop.f32.mrf.mxu0
    %v172 = vadd.f32 %v98, %v171
    %v173 = vpop.f32.mrf.mxu0
    %174 = vdwg.mxu0
    %v175 = vmul.f32 %v167, 0.5
    %v176 = vmul.f32 %v172, 0.5
    %v177 = vmul.f32 %v167, 0.70710677
    %v178 = vmul.f32 %v172, 0.70710677
    %v179 = verf.f32.pop %v177
    %v180 = verf.f32.pop %v178
    %v181 = vadd.f32 %v179, 1.0
    %v182 = vadd.f32 %v180, 1.0
    %v183 = vmul.f32 %v175, %v181
    %v184 = vmul.f32 %v176, %v182
    %v185 = vld [vmem:[#allocation8] sm:$0xff]
    %v186 = vld [vmem:[#allocation8 + $0x8] sm:$0xff]
    %v187 = vld [vmem:[#allocation7] sm:$0xff]
    %v188 = vld [vmem:[#allocation7 + $0x8] sm:$0xff]
    %v189 = vld [vmem:[#allocation7 + $0x10] sm:$0xff]
    %v190 = vld [vmem:[#allocation7 + $0x18] sm:$0xff]
    %v191 = vld [vmem:[#allocation7 + $0x20] sm:$0xff]
    %v192 = vld [vmem:[#allocation7 + $0x28] sm:$0xff]
    %v193 = vld [vmem:[#allocation7 + $0x30] sm:$0xff]
    %v194 = vld [vmem:[#allocation7 + $0x38] sm:$0xff]
    %v195 = vld [vmem:[#allocation7 + $0x40] sm:$0xff]
    %v196 = vld [vmem:[#allocation7 + $0x48] sm:$0xff]
    %v197 = vld [vmem:[#allocation7 + $0x50] sm:$0xff]
    %v198 = vld [vmem:[#allocation7 + $0x58] sm:$0xff]
    %v199 = vld [vmem:[#allocation7 + $0x60] sm:$0xff]
    %v200 = vld [vmem:[#allocation7 + $0x68] sm:$0xff]
    %v201 = vld [vmem:[#allocation7 + $0x70] sm:$0xff]
    %v202 = vld [vmem:[#allocation7 + $0x78] sm:$0xff]
    %203 = vmatprep.subr.mxu0 0.0
    %204 = vmatpush1.msra.mxu0 %v202
    %205 = vmatprep.subr.mxu0 0.0
    %206 = vmatpush1.msra.mxu0 %v201
    %207 = vmatprep.subr.mxu0 0.0
    %208 = vmatpush1.msra.mxu0 %v200
    %209 = vmatprep.subr.mxu0 0.0
    %210 = vmatpush1.msra.mxu0 %v199
    %211 = vmatprep.subr.mxu0 0.0
    %212 = vmatpush1.msra.mxu0 %v198
    %213 = vmatprep.subr.mxu0 0.0
    %214 = vmatpush1.msra.mxu0 %v197
    %215 = vmatprep.subr.mxu0 0.0
    %216 = vmatpush1.msra.mxu0 %v196
    %217 = vmatprep.subr.mxu0 0.0
    %218 = vmatpush1.msra.mxu0 %v195
    %219 = vmatprep.subr.mxu0 0.0
    %220 = vmatpush1.msra.mxu0 %v194
    %221 = vmatprep.subr.mxu0 0.0
    %222 = vmatpush1.msra.mxu0 %v193
    %223 = vmatprep.subr.mxu0 0.0
    %224 = vmatpush1.msra.mxu0 %v192
    %225 = vmatprep.subr.mxu0 0.0
    %226 = vmatpush1.msra.mxu0 %v191
    %227 = vmatprep.subr.mxu0 0.0
    %228 = vmatpush1.msra.mxu0 %v190
    %229 = vmatprep.subr.mxu0 0.0
    %230 = vmatpush1.msra.mxu0 %v189
    %231 = vmatprep.subr.mxu0 0.0
    %232 = vmatpush1.msra.mxu0 %v188
    %233 = vmatprep.subr.mxu0 0.0
    %234 = vmatpush1.msra.mxu0 %v187
    %235 = vmatprep.subr.mxu0 0.0
    %236 = vmatpush2.msra.mxu0 0.0
    %237 = vmatprep.subr.mxu0 0.0
    %238 = vmatpush2.msra.mxu0 0.0
    %239 = vmatprep.subr.mxu0 0.0
    %240 = vmatpush2.msra.mxu0 0.0
    %241 = vmatprep.subr.mxu0 0.0
    %242 = vmatpush2.msra.mxu0 0.0
    %243 = vmatprep.subr.mxu0 0.0
    %244 = vmatpush2.msra.mxu0 0.0
    %245 = vmatprep.subr.mxu0 0.0
    %246 = vmatpush2.msra.mxu0 0.0
    %247 = vmatprep.subr.mxu0 0.0
    %248 = vmatpush2.msra.mxu0 0.0
    %249 = vmatprep.subr.mxu0 0.0
    %250 = vmatpush2.msra.mxu0 0.0
    %251 = vmatprep.subr.mxu0 0.0
    %252 = vmatpush2.msra.mxu0 0.0
    %253 = vmatprep.subr.mxu0 0.0
    %254 = vmatpush2.msra.mxu0 0.0
    %255 = vmatprep.subr.mxu0 0.0
    %256 = vmatpush2.msra.mxu0 0.0
    %257 = vmatprep.subr.mxu0 0.0
    %258 = vmatpush2.msra.mxu0 0.0
    %259 = vmatprep.subr.mxu0 0.0
    %260 = vmatpush2.msra.mxu0 0.0
    %261 = vmatprep.subr.mxu0 0.0
    %262 = vmatpush2.msra.mxu0 0.0
    %263 = vmatprep.subr.mxu0 0.0
    %264 = vmatpush2.msra.mxu0 0.0
    %265 = vmatprep.subr.mxu0 0.0
    %266 = vmatpush2.msra.mxu0 0.0
    %267 = vmatprep.mubr.f32.mxu0 0.0
    %268 = vmatmul.mubr.f32.gmra.mxu0 %v183
    %v269 = vpop.f32.mrf.mxu0
    %v270 = vadd.f32 0.0, %v269
    %v271 = vpop.f32.mrf.mxu0
    %272 = vmatprep.mubr.f32.mxu0 0.0
    %273 = vmatmul.mubr.f32.gmra.mxu0 %v184
    %v274 = vpop.f32.mrf.mxu0
    %v275 = vadd.f32 0.0, %v274
    %v276 = vpop.f32.mrf.mxu0
    %277 = vdwg.mxu0
    %v278 = vadd.f32 %v185, %v270
    %v279 = vadd.f32 %v186, %v275
    %280 = vst [vmem:[#allocation8] sm:$0xff] %v278
    %281 = vst [vmem:[#allocation8 + $0x8] sm:$0xff] %v279
    // Predicated region
    $region38: #{tpu_custom_call.1} parent=1 // pred_check
      _
    $region39: #{tpu_custom_call.1} parent=1 // pred_check_branch
      %283 = sbr.rel (0) target = $region41
    $region40: #{tpu_custom_call.1} parent=1 // pred_region
      %s285 = ssub.s32 256, 256
      %286 = vsyncadd [#allocation4], %s285
      %s287 = sshll.u32 [#allocation8], 4
      %s288 = int_to_ptr.vmem [resolvable:$true] %s287
      %293 = dma.vmem_to_hbm [thread:$0]  %s288, 256, %s5, [#allocation4], 128, 128, 8
    $region41: #{tpu_custom_call.1} parent=1 // pred_fallthru
      _
    // Predicated region
    $region42: #{tpu_custom_call.1} parent=1 // pred_check
      _
    $region43: #{tpu_custom_call.1} parent=1 // pred_check_branch
      %295 = sbr.rel (0) target = $region45
    $region44: #{tpu_custom_call.1} parent=1 // pred_region
      %296 = dma.done [#allocation4], 256
    $region45: #{tpu_custom_call.1} parent=1 // pred_fallthru
      _
    %297 = vsyncpa [#allocation3], 1
    %298 = vsyncpa [#allocation6], 1
    %299 = vsyncpa [#allocation4], 1

</llo_original>
